<compile_context>
chip_gen: v7x
topology: tpu7x:2x2x1
jax: 0.10.0
libtpu: 0.0.40
codegen_flags: <defaults>
</compile_context>

<pallas_src>
import math
import random

import numpy as np
import jax
import jax.numpy as jnp
from jax.experimental import pallas as pl
from jax.experimental.pallas import tpu as pltpu

# Standard CTPN anchor heights (referenced as a global by AnchorData).
ANCHOR_HEIGHTS = [11, 16, 23, 33, 48, 68, 97, 139, 198, 283]

_LANES = 128        # lane width of the packed sample slab (Ns <= 128 default)


# ----------------------------------------------------------------------------
# AnchorData: faithful port of the reference (pure Python, host side)
# ----------------------------------------------------------------------------
class AnchorData:
    _memory = {}

    def __init__(self, index, anchors_list, height, width, k=10,
                 fixed_width=16, memoize=True):
        self._index = index
        self._height = height
        self._width = width
        self._k = k
        self._fixed_width = fixed_width
        self._memoize = memoize
        self.data = self._get_data(anchors_list)

    def _get_data(self, anchors_list):
        if self._memoize:
            if self._index not in self._memory:
                self._memory[self._index] = self._get_data_(anchors_list)
            return self._memory[self._index]
        return self._get_data_(anchors_list)

    def _get_data_(self, anchors_list):
        def cal_iou(cy, h, cy_gt, h_gt):
            overlap = max(
                h + h_gt - (max(cy + h / 2, cy_gt + h_gt / 2)
                            - min(cy - h / 2, cy_gt - h_gt / 2)), 0)
            return overlap / (h + h_gt - overlap)

        data = {}
        for y in range(self._height):
            for x in range(self._width):
                for z in range(self._k):
                    data[y, x, z] = (-1, 0, 0.0, 0.0, 0.0, 0.0)
        for anchors in anchors_list:
            for i, anchor in enumerate(anchors):
                idx_max = (0, 0, 0)
                result_max = None
                need_max = True
                x_gt, cy_gt, ah_gt = anchor
                x_fm = x_gt // self._fixed_width
                if x_fm < 0 or x_fm >= self._width:
                    continue
                for y_fm in range(self._height):
                    for z, ah in enumerate(ANCHOR_HEIGHTS):
                        cy_a = y_fm * self._fixed_width
                        iou = cal_iou(cy_a, ah, cy_gt, ah_gt)
                        if i == 0:
                            side = -1
                            o = x_gt / self._fixed_width - x_fm
                        elif i == len(anchors) - 1:
                            side = 1
                            o = x_gt / self._fixed_width - x_fm
                        else:
                            side = 0
                            o = 0.0
                        text = -1
                        vc = (cy_gt - cy_a) / ah
                        vh = math.log(ah_gt / ah)
                        result = (text, side, vc, vh, o, iou)
                        if iou > 0.7:
                            need_max = False
                            text = 1
                            result = (text, side, vc, vh, o, iou)
                            if data[y_fm, int(x_fm), z][0] != 1:
                                data[y_fm, int(x_fm), z] = result
                            elif data[y_fm, int(x_fm), z][-1] < iou:
                                data[y_fm, int(x_fm), z] = result
                        if need_max and iou > 0.0:
                            if result_max is None or iou > result_max[-1]:
                                idx_max = (y_fm, int(x_fm), z)
                                result_max = (1, *result[1:])
                if need_max:
                    data[idx_max] = result_max
        return data

    def get(self, h, w, k):
        return self.data.get((h, w, k))


# ----------------------------------------------------------------------------
# Pallas kernel: softplus CE + full-vreg SmoothL1 + three lane reductions
# ----------------------------------------------------------------------------
def _ctpn_loss_kernel(scal_ref, p_ref, out_ref, red_ref):
    """scal_ref (SMEM, (8,) f32):
         [0] 1/max(n_cls,1)  [1] 1/n_v (0 if none)  [2] 1/n_o (0 if none)
         [3] lambda1          [4] lambda2            [5..7] unused
       p_ref (VMEM, (16, L) f32) packed sample slab, rows:
         0:l0 1:l1 2:label 3:vp0 4:vp1 5:op 6:m_cls 7:m_v
         8:0  9:0  10:m_o  11:vt0 12:vt1 13:ot 14:0 15:0
       out_ref (SMEM, (4,) f32): [loss, avg_cls, avg_reg_v, avg_reg_o]
       red_ref (VMEM, (8, 1) f32): tiny staging buffer for the scalar results
         (kept on purpose: the vector->SMEM hand-off goes through the proven
          ref path; its cost is a few masked lane-0 stores in the epilogue).
    """
    inv_cls = scal_ref[0]
    inv_v = scal_ref[1]
    inv_o = scal_ref[2]
    lam1 = scal_ref[3]
    lam2 = scal_ref[4]

    p = p_ref[...]                 # two full-vreg loads, no sublane-sliced refs
    pred = p[0:8, :]
    tgt = p[8:16, :]

    # Smooth-L1 on the whole (8, L) stack at once; only rows 3,4,5 are real
    # regression diffs (the other rows are masked / unused below).
    d = pred - tgt
    ad = jnp.abs(d)
    sl1 = jnp.where(ad < 1.0, 0.5 * d * d, ad - 0.5)

    l0 = pred[0:1, :]
    l1 = pred[1:2, :]
    lab = pred[2:3, :]
    m_cls = pred[6:7, :]           # host-built lane-validity masks (0/1 rows):
    m_v = pred[7:8, :]             #   no iota / count compares needed at all
    m_o = tgt[2:3, :]              # slab row 10

    # 2-class cross entropy as a stable softplus of the logit margin:
    # CE = softplus(other - target)  ->  one exp + one log on the EUP.
    z = jnp.where(lab > 0.5, l0 - l1, l1 - l0)
    ce = (jnp.maximum(z, 0.0) + jnp.log(1.0 + jnp.exp(-jnp.abs(z)))) * m_cls
    lv = 0.5 * (sl1[3:4, :] + sl1[4:5, :]) * m_v
    lo = sl1[5:6, :] * m_o

    # Three independent lane reductions (no (8,L) zero-row concatenate and no
    # full-width row_loss vector); the 1/count scaling happens AFTER the
    # reduce and the final lambda combine is done on (1,1) values, so the
    # extra work is a handful of scalar-broadcast ops on single elements.
    s_cls = jnp.sum(ce, axis=1, keepdims=True) * inv_cls
    s_v = jnp.sum(lv, axis=1, keepdims=True) * inv_v
    s_o = jnp.sum(lo, axis=1, keepdims=True) * inv_o
    s_loss = s_cls + lam1 * s_v + lam2 * s_o

    red_ref[0:1, :] = s_loss
    red_ref[1:2, :] = s_cls
    red_ref[2:3, :] = s_v
    red_ref[3:4, :] = s_o
    out_ref[0] = red_ref[0, 0]   # loss
    out_ref[1] = red_ref[1, 0]   # avg_loss_cls
    out_ref[2] = red_ref[2, 0]   # avg_loss_reg_v
    out_ref[3] = red_ref[3, 0]   # avg_loss_reg_o


def _ctpn_forward_fn(scores, vcoords, sides, tbl):
    """Jitted end-to-end forward: ONE gather + ONE pack + the Pallas kernel.
    `tbl` is the single packed (16, L) int32 host upload:
      rows 0..4 : int32 gather indices for l0, l1, vp0, vp1, op into the
                  concatenated flat heads (base offsets pre-applied on host)
      row  5    : f32 bits [inv_cls, inv_v, inv_o, lambda1, lambda2, ...]
      rows 6..15: f32 bits [lab, m_cls, m_v, 0, 0, m_o, vt0, vt1, ot, 0]
    The detector heads never leave the device and are never mapped into VMEM
    blocks (only the (16, L) slab is)."""
    lanes = tbl.shape[1]

    heads = jnp.concatenate(
        [scores.reshape(-1), vcoords.reshape(-1), sides.reshape(-1)])
    idx = tbl[0:5, :].reshape(-1)
    # ONE gather for all five predicted rows; cast AFTER the take so only the
    # 5*L gathered values are converted, never the full heads.
    g = jnp.take(heads, idx).astype(jnp.float32).reshape(5, lanes)

    hostf = jax.lax.bitcast_convert_type(tbl[6:16, :], jnp.float32)   # (10, L)
    scal = jax.lax.bitcast_convert_type(tbl[5, 0:8], jnp.float32)     # (8,)
    zrow = jnp.zeros((1, lanes), jnp.float32)

    packed = jnp.concatenate(
        [g[0:2, :],        # rows 0,1   : l0, l1
         hostf[0:1, :],    # row  2     : label
         g[2:5, :],        # rows 3..5  : vp0, vp1, op
         hostf[1:10, :],   # rows 6..14 : m_cls, m_v, 0, 0, m_o, vt0, vt1, ot, 0
         zrow],            # row  15
        axis=0)            # (16, L)

    cost = pl.CostEstimate(flops=16 * lanes * 12,
                           transcendentals=2 * lanes,
                           bytes_accessed=(16 * lanes + 8 + 4) * 4)
    return pl.pallas_call(
        _ctpn_loss_kernel,
        out_shape=jax.ShapeDtypeStruct((4,), jnp.float32),
        in_specs=[pl.BlockSpec(memory_space=pltpu.MemorySpace.SMEM),
                  pl.BlockSpec(memory_space=pltpu.MemorySpace.VMEM)],
        out_specs=pl.BlockSpec(memory_space=pltpu.MemorySpace.SMEM),
        scratch_shapes=[pltpu.VMEM((8, 1), jnp.float32)],
        cost_estimate=cost,
    )(scal, packed)


# ----------------------------------------------------------------------------
# CTPNLoss wrapper (host-side sampling glue around the jitted device path)
# ----------------------------------------------------------------------------
class CTPNLossPallas:
    def __init__(self, Ns=128, k=10):
        self._Ns = Ns
        self._k = k
        self._ratio = 0.5
        self._lambda1 = 1.0
        self._lambda2 = 2.0
        self._lanes = max(_LANES, ((int(Ns) + _LANES - 1) // _LANES) * _LANES)
        # Built and jitted once; reused across calls (no per-call retrace for
        # a fixed head shape).
        self._forward = jax.jit(_ctpn_forward_fn)

    def _build_table(self, pos, neg, anchor_data, h, w):
        """ONE packed (16, lanes) int32 host table -> one H2D copy per call."""
        hw = h * w
        k = self._k
        L = self._lanes
        base_v = 2 * k * hw            # vcoords offset in the concat-flat heads
        base_o = 4 * k * hw            # sides offset

        idx = np.zeros((5, L), np.int32)
        hostf = np.zeros((10, L), np.float32)
        scal_row = np.zeros((L,), np.float32)

        n_pos = len(pos)
        n_neg = len(neg)
        n_cls = n_pos + n_neg

        oi = 0
        for i, (yi, xi, zi) in enumerate(pos):        # positives: lanes [0, n_pos)
            d = anchor_data.get(yi, xi, zi)
            ci = (2 * zi) * hw + yi * w + xi
            idx[0, i] = ci                    # l0
            idx[1, i] = ci + hw               # l1
            idx[2, i] = base_v + ci           # vp0
            idx[3, i] = base_v + ci + hw      # vp1
            hostf[0, i] = 1.0                 # label
            hostf[6, i] = d[2]                # vt0 (vc)
            hostf[7, i] = d[3]                # vt1 (vh)
            if d[1] != 0:                     # side-refinement sample, compacted
                idx[4, oi] = base_o + zi * hw + yi * w + xi
                hostf[8, oi] = d[4]           # ot
                oi += 1
        for j, (yi, xi, zi) in enumerate(neg):        # negatives after positives
            ci = (2 * zi) * hw + yi * w + xi
            li = n_pos + j
            idx[0, li] = ci
            idx[1, li] = ci + hw

        hostf[1, :n_cls] = 1.0                # m_cls
        hostf[2, :n_pos] = 1.0                # m_v
        hostf[5, :oi] = 1.0                   # m_o

        inv_cls = 1.0 / max(float(n_cls), 1.0)
        inv_v = (1.0 / n_pos) if n_pos > 0 else 0.0
        inv_o = (1.0 / oi) if oi > 0 else 0.0
        scal_row[0:5] = [inv_cls, inv_v, inv_o, self._lambda1, self._lambda2]

        tbl = np.zeros((16, L), np.int32)
        tbl[0:5] = idx
        tbl[5] = scal_row.view(np.int32)
        tbl[6:16] = hostf.view(np.int32)
        return tbl

    def __call__(self, inputs, targets):
        # TODO(synk): random.shuffle sampling + AnchorData GT assignment stay
        # as host Python (data-dependent control flow, no Pallas equivalent).
        def get_choices(h, w, k):
            idx_lst = list(range(h * w * k))
            random.shuffle(idx_lst)
            chs = []
            for idx in idx_lst:
                yi = idx // (w * k)
                xi = idx % (w * k) // k
                zi = idx % (w * k) % k
                chs.append((yi, xi, zi))
            return chs

        vcoords, scores, sides = inputs
        _, _, h, w = scores.shape
        index, anchors_list = targets
        anchor_data = AnchorData(int(index), anchors_list, h, w, k=self._k)
        choices = get_choices(h, w, self._k)
        n_pos = int(self._Ns * self._ratio)
        n_neg = self._Ns - n_pos
        pos, neg = [], []
        for yi, xi, zi in choices:
            data = anchor_data.get(yi, xi, zi)
            if data[0] == 1 and len(pos) < self._Ns:
                pos.append((yi, xi, zi))
            elif data[0] == -1 and len(neg) < self._Ns:
                neg.append((yi, xi, zi))
            else:
                continue
            if len(pos) > n_pos and len(neg) > n_neg:
                break
        pos = pos[:n_pos]
        neg = neg[:self._Ns - len(pos)]

        tbl = self._build_table(pos, neg, anchor_data, h, w)
        # out = [loss, avg_loss_cls, avg_loss_reg_v, avg_loss_reg_o] stays on
        # device; only pull it to host when logging (a per-step blocking fetch
        # stalls the dispatch pipeline for longer than the kernel runs).
        out = self._forward(scores, vcoords, sides, tbl)
        info = {"pos": pos, "neg": neg, "anchor_data": anchor_data}
        return out, info


# ----------------------------------------------------------------------------
# Pure numpy/python reference mirroring the PyTorch forward (test only)
# ----------------------------------------------------------------------------
def _numpy_reference(scores, vcoords, sides, pos, neg, anchor_data,
                     lambda1=1.0, lambda2=2.0):
    s = np.asarray(scores, dtype=np.float64)
    v = np.asarray(vcoords, dtype=np.float64)
    o = np.asarray(sides, dtype=np.float64)

    def sl1(x):
        ax = abs(x)
        return 0.5 * x * x if ax < 1.0 else ax - 0.5

    def ce2(l0, l1, t):
        m = max(l0, l1)
        lse = m + math.log(math.exp(l0 - m) + math.exp(l1 - m))
        return lse - (l1 if t == 1 else l0)

    loss_cls, loss_v, loss_o = [], [], []
    for yi, xi, zi in pos:
        d = anchor_data.get(yi, xi, zi)
        loss_cls.append(ce2(s[0, 2 * zi, yi, xi], s[0, 2 * zi + 1, yi, xi], 1))
        loss_v.append(0.5 * (sl1(v[0, 2 * zi, yi, xi] - d[2])
                             + sl1(v[0, 2 * zi + 1, yi, xi] - d[3])))
        if d[1] != 0:
            loss_o.append(sl1(o[0, zi, yi, xi] - d[4]))
    for yi, xi, zi in neg:
        loss_cls.append(ce2(s[0, 2 * zi, yi, xi], s[0, 2 * zi + 1, yi, xi], 0))

    avg_cls = sum(loss_cls) / len(loss_cls) if loss_cls else 0.0
    avg_v = sum(loss_v) / len(loss_v) if loss_v else 0.0
    avg_o = sum(loss_o) / len(loss_o) if loss_o else 0.0
    loss = avg_cls + lambda1 * avg_v + lambda2 * avg_o
    return np.array([loss, avg_cls, avg_v, avg_o], dtype=np.float64)


if __name__ == "__main__":
    random.seed(0)
    key = jax.random.PRNGKey(0)
    k1, k2, k3 = jax.random.split(key, 3)

    H, W, K = 8, 16, 10
    scores = jax.random.normal(k1, (1, 2 * K, H, W), dtype=jnp.float32)
    vcoords = jax.random.normal(k2, (1, 2 * K, H, W), dtype=jnp.float32)
    sides = jax.random.normal(k3, (1, K, H, W), dtype=jnp.float32)

    # Two synthetic text lines split into fixed-width (16 px) GT anchors.
    anchors_list = [
        [(8.0, 30.0, 24), (24.0, 31.0, 24), (40.0, 32.0, 24), (56.0, 33.0, 24)],
        [(100.0, 80.0, 48), (116.0, 80.0, 48), (132.0, 80.0, 48)],
    ]

    loss_fn = CTPNLossPallas(Ns=128, k=K)
    out, info = loss_fn((vcoords, scores, sides), (0, anchors_list))
    out = jax.block_until_ready(out)

    # Single device->host fetch of all four scalars (only done here because we
    # validate against the numpy reference; training loops should keep `out`
    # on device and fetch asynchronously/batched when logging).
    got = np.asarray(jax.device_get(out), dtype=np.float64)
    ref = _numpy_reference(jax.device_get(scores), jax.device_get(vcoords),
                           jax.device_get(sides),
                           info["pos"], info["neg"], info["anchor_data"])
    np.testing.assert_allclose(got, ref, rtol=1e-4, atol=1e-5)
    print("KERNEL_OK")
</pallas_src>

<mosaic_0001>
module attributes {stable_mosaic.version = 11 : i64} {
  func.func @_ctpn_loss_kernel(%arg0: memref<8xf32, #tpu.memory_space<smem>>, %arg1: memref<16x128xf32, #tpu.memory_space<vmem>>, %arg2: memref<4xf32, #tpu.memory_space<smem>>, %arg3: memref<8x1xf32, #tpu.memory_space<vmem>>) attributes {dimension_semantics = [], scalar_prefetch = 0 : i64, scratch_operands = 1 : i64, tpu.core_type = #tpu.core_type<tc>} {
    %c0 = arith.constant 0 : index
    %0 = memref.load %arg0[%c0] : memref<8xf32, #tpu.memory_space<smem>>
    %c1 = arith.constant 1 : index
    %1 = memref.load %arg0[%c1] : memref<8xf32, #tpu.memory_space<smem>>
    %c2 = arith.constant 2 : index
    %2 = memref.load %arg0[%c2] : memref<8xf32, #tpu.memory_space<smem>>
    %c3 = arith.constant 3 : index
    %3 = memref.load %arg0[%c3] : memref<8xf32, #tpu.memory_space<smem>>
    %c4 = arith.constant 4 : index
    %4 = memref.load %arg0[%c4] : memref<8xf32, #tpu.memory_space<smem>>
    %c0_0 = arith.constant 0 : index
    %c0_1 = arith.constant 0 : index
    %5 = vector.load %arg1[%c0_0, %c0_1] : memref<16x128xf32, #tpu.memory_space<vmem>>, vector<16x128xf32>
    %6 = vector.extract_strided_slice %5 {offsets = [0, 0], sizes = [8, 128], strides = [1, 1]} : vector<16x128xf32> to vector<8x128xf32>
    %7 = vector.extract_strided_slice %5 {offsets = [8, 0], sizes = [8, 128], strides = [1, 1]} : vector<16x128xf32> to vector<8x128xf32>
    %8 = arith.subf %6, %7 : vector<8x128xf32>
    %9 = math.absf %8 : vector<8x128xf32>
    %cst = arith.constant 1.000000e+00 : f32
    %10 = vector.broadcast %cst : f32 to vector<8x128xf32>
    %11 = arith.cmpf olt, %9, %10 : vector<8x128xf32>
    %cst_2 = arith.constant 5.000000e-01 : f32
    %12 = vector.broadcast %cst_2 : f32 to vector<8x128xf32>
    %13 = arith.mulf %12, %8 : vector<8x128xf32>
    %14 = arith.mulf %13, %8 : vector<8x128xf32>
    %cst_3 = arith.constant 5.000000e-01 : f32
    %15 = vector.broadcast %cst_3 : f32 to vector<8x128xf32>
    %16 = arith.subf %9, %15 : vector<8x128xf32>
    %17 = arith.select %11, %14, %16 : vector<8x128xi1>, vector<8x128xf32>
    %18 = vector.extract_strided_slice %6 {offsets = [0, 0], sizes = [1, 128], strides = [1, 1]} : vector<8x128xf32> to vector<1x128xf32>
    %19 = vector.extract_strided_slice %6 {offsets = [1, 0], sizes = [1, 128], strides = [1, 1]} : vector<8x128xf32> to vector<1x128xf32>
    %20 = vector.extract_strided_slice %6 {offsets = [2, 0], sizes = [1, 128], strides = [1, 1]} : vector<8x128xf32> to vector<1x128xf32>
    %21 = vector.extract_strided_slice %6 {offsets = [6, 0], sizes = [1, 128], strides = [1, 1]} : vector<8x128xf32> to vector<1x128xf32>
    %22 = vector.extract_strided_slice %6 {offsets = [7, 0], sizes = [1, 128], strides = [1, 1]} : vector<8x128xf32> to vector<1x128xf32>
    %23 = vector.extract_strided_slice %7 {offsets = [2, 0], sizes = [1, 128], strides = [1, 1]} : vector<8x128xf32> to vector<1x128xf32>
    %cst_4 = arith.constant 5.000000e-01 : f32
    %24 = vector.broadcast %cst_4 : f32 to vector<1x128xf32>
    %25 = arith.cmpf ogt, %20, %24 : vector<1x128xf32>
    %26 = arith.subf %18, %19 : vector<1x128xf32>
    %27 = arith.subf %19, %18 : vector<1x128xf32>
    %28 = arith.select %25, %26, %27 : vector<1x128xi1>, vector<1x128xf32>
    %cst_5 = arith.constant 0.000000e+00 : f32
    %29 = vector.broadcast %cst_5 : f32 to vector<1x128xf32>
    %30 = arith.maximumf %28, %29 : vector<1x128xf32>
    %31 = math.absf %28 : vector<1x128xf32>
    %cst_6 = arith.constant 0.000000e+00 : f32
    %32 = vector.broadcast %cst_6 : f32 to vector<1x128xf32>
    %33 = arith.subf %32, %31 : vector<1x128xf32>
    %34 = math.exp %33 : vector<1x128xf32>
    %cst_7 = arith.constant 1.000000e+00 : f32
    %35 = vector.broadcast %cst_7 : f32 to vector<1x128xf32>
    %36 = arith.addf %35, %34 : vector<1x128xf32>
    %37 = math.log %36 : vector<1x128xf32>
    %38 = arith.addf %30, %37 : vector<1x128xf32>
    %39 = arith.mulf %38, %21 : vector<1x128xf32>
    %40 = vector.extract_strided_slice %17 {offsets = [3, 0], sizes = [1, 128], strides = [1, 1]} : vector<8x128xf32> to vector<1x128xf32>
    %41 = vector.extract_strided_slice %17 {offsets = [4, 0], sizes = [1, 128], strides = [1, 1]} : vector<8x128xf32> to vector<1x128xf32>
    %42 = arith.addf %40, %41 : vector<1x128xf32>
    %cst_8 = arith.constant 5.000000e-01 : f32
    %43 = vector.broadcast %cst_8 : f32 to vector<1x128xf32>
    %44 = arith.mulf %43, %42 : vector<1x128xf32>
    %45 = arith.mulf %44, %22 : vector<1x128xf32>
    %46 = vector.extract_strided_slice %17 {offsets = [5, 0], sizes = [1, 128], strides = [1, 1]} : vector<8x128xf32> to vector<1x128xf32>
    %47 = arith.mulf %46, %23 : vector<1x128xf32>
    %cst_9 = arith.constant dense<0.000000e+00> : vector<1xf32>
    %48 = vector.multi_reduction <add>, %39, %cst_9 [1] : vector<1x128xf32> to vector<1xf32>
    %49 = vector.shape_cast %48 : vector<1xf32> to vector<1x1xf32>
    %50 = vector.broadcast %0 : f32 to vector<1x1xf32>
    %51 = arith.mulf %49, %50 : vector<1x1xf32>
    %cst_10 = arith.constant dense<0.000000e+00> : vector<1xf32>
    %52 = vector.multi_reduction <add>, %45, %cst_10 [1] : vector<1x128xf32> to vector<1xf32>
    %53 = vector.shape_cast %52 : vector<1xf32> to vector<1x1xf32>
    %54 = vector.broadcast %1 : f32 to vector<1x1xf32>
    %55 = arith.mulf %53, %54 : vector<1x1xf32>
    %cst_11 = arith.constant dense<0.000000e+00> : vector<1xf32>
    %56 = vector.multi_reduction <add>, %47, %cst_11 [1] : vector<1x128xf32> to vector<1xf32>
    %57 = vector.shape_cast %56 : vector<1xf32> to vector<1x1xf32>
    %58 = vector.broadcast %2 : f32 to vector<1x1xf32>
    %59 = arith.mulf %57, %58 : vector<1x1xf32>
    %60 = vector.broadcast %3 : f32 to vector<1x1xf32>
    %61 = arith.mulf %60, %55 : vector<1x1xf32>
    %62 = arith.addf %51, %61 : vector<1x1xf32>
    %63 = vector.broadcast %4 : f32 to vector<1x1xf32>
    %64 = arith.mulf %63, %59 : vector<1x1xf32>
    %65 = arith.addf %62, %64 : vector<1x1xf32>
    %c0_12 = arith.constant 0 : index
    %c0_13 = arith.constant 0 : index
    %66 = vector.load %arg3[%c0_12, %c0_13] : memref<8x1xf32, #tpu.memory_space<vmem>>, vector<1x1xf32>
    tpu.vector_store %arg3[%c0_12, %c0_13], %65 {strides = array<i32>} : memref<8x1xf32, #tpu.memory_space<vmem>>, vector<1x1xf32>,
    %c1_14 = arith.constant 1 : index
    %c0_15 = arith.constant 0 : index
    %67 = vector.load %arg3[%c1_14, %c0_15] : memref<8x1xf32, #tpu.memory_space<vmem>>, vector<1x1xf32>
    tpu.vector_store %arg3[%c1_14, %c0_15], %51 {strides = array<i32>} : memref<8x1xf32, #tpu.memory_space<vmem>>, vector<1x1xf32>,
    %c2_16 = arith.constant 2 : index
    %c0_17 = arith.constant 0 : index
    %68 = vector.load %arg3[%c2_16, %c0_17] : memref<8x1xf32, #tpu.memory_space<vmem>>, vector<1x1xf32>
    tpu.vector_store %arg3[%c2_16, %c0_17], %55 {strides = array<i32>} : memref<8x1xf32, #tpu.memory_space<vmem>>, vector<1x1xf32>,
    %c3_18 = arith.constant 3 : index
    %c0_19 = arith.constant 0 : index
    %69 = vector.load %arg3[%c3_18, %c0_19] : memref<8x1xf32, #tpu.memory_space<vmem>>, vector<1x1xf32>
    tpu.vector_store %arg3[%c3_18, %c0_19], %59 {strides = array<i32>} : memref<8x1xf32, #tpu.memory_space<vmem>>, vector<1x1xf32>,
    %c0_20 = arith.constant 0 : index
    %c0_21 = arith.constant 0 : index
    %70 = vector.load %arg3[%c0_20, %c0_21] : memref<8x1xf32, #tpu.memory_space<vmem>>, vector<1x1xf32>
    %71 = vector.extract %70[0, 0] : f32 from vector<1x1xf32>
    %c0_22 = arith.constant 0 : index
    %72 = memref.load %arg2[%c0_22] : memref<4xf32, #tpu.memory_space<smem>>
    memref.store %71, %arg2[%c0_22] : memref<4xf32, #tpu.memory_space<smem>>
    %c1_23 = arith.constant 1 : index
    %c0_24 = arith.constant 0 : index
    %73 = vector.load %arg3[%c1_23, %c0_24] : memref<8x1xf32, #tpu.memory_space<vmem>>, vector<1x1xf32>
    %74 = vector.extract %73[0, 0] : f32 from vector<1x1xf32>
    %c1_25 = arith.constant 1 : index
    %75 = memref.load %arg2[%c1_25] : memref<4xf32, #tpu.memory_space<smem>>
    memref.store %74, %arg2[%c1_25] : memref<4xf32, #tpu.memory_space<smem>>
    %c2_26 = arith.constant 2 : index
    %c0_27 = arith.constant 0 : index
    %76 = vector.load %arg3[%c2_26, %c0_27] : memref<8x1xf32, #tpu.memory_space<vmem>>, vector<1x1xf32>
    %77 = vector.extract %76[0, 0] : f32 from vector<1x1xf32>
    %c2_28 = arith.constant 2 : index
    %78 = memref.load %arg2[%c2_28] : memref<4xf32, #tpu.memory_space<smem>>
    memref.store %77, %arg2[%c2_28] : memref<4xf32, #tpu.memory_space<smem>>
    %c3_29 = arith.constant 3 : index
    %c0_30 = arith.constant 0 : index
    %79 = vector.load %arg3[%c3_29, %c0_30] : memref<8x1xf32, #tpu.memory_space<vmem>>, vector<1x1xf32>
    %80 = vector.extract %79[0, 0] : f32 from vector<1x1xf32>
    %c3_31 = arith.constant 3 : index
    %81 = memref.load %arg2[%c3_31] : memref<4xf32, #tpu.memory_space<smem>>
    memref.store %80, %arg2[%c3_31] : memref<4xf32, #tpu.memory_space<smem>>
    return
  }
}

</mosaic_0001>

<llo_original>
// kernel: _ctpn_forward_fn.1
$region0: #{_ctpn_forward_fn.1}
  #allocation0 [shape = 'u32[]', space=smem, size = 0x4, offset = 0x4, fixed_abs, tag = 'smem constant byte address 0x4 - core index']
  #allocation1 [shape = 'u32[144,128]{1,0:T(1,128)}', space=vmem, size = 0x12000, scoped, tag = 'internal scratch']
  #allocation2 [shape = 'f32[8,1]{1,0:T(8,128)}', space=vmem, size = 0x1000, scoped, tag = 'scratch operand']
  %s0 = inlined_call_operand.vmem [shape: f32[8], index: 0, kind: input, shape index: {}]
  %s1 = inlined_call_operand.vmem [shape: f32[16,128], index: 1, kind: input, shape index: {}]
  %s2 = inlined_call_operand.hbm [shape: f32[4], index: 2, kind: output, shape index: {}]
  %s3 = sld [smem:[#allocation0]]
  $region22: #{_ctpn_forward_fn.1} parent=0
    _
  %s5 = ssub.s32 1, %s3
  %s6 = scalar_select 0, %s5, %s3
  $region1: #{_ctpn_forward_fn.1} parent=0
    #allocation3 [shape = 'u8[512]{0}', space=smem, size = 0x200, scoped, tag = 'input window, operand 0, single buffered']
    #allocation4 [shape = 's32[1]{0}', space=sflag, size = 0x4, scoped, tag = 'scoped memory for _ctpn_forward_fn.1']
    #allocation5 [shape = 's32[1]{0}', space=sflag, size = 0x4, scoped, tag = 'scoped memory for _ctpn_forward_fn.1']
    #allocation6 [shape = 'u8[512]{0}', space=smem, size = 0x200, scoped, tag = 'output window, operand 0, single buffered']
    %7 = vsyncpa [#allocation5], 0
    %8 = vsyncpa [#allocation4], 0
    // Predicated region
    $region2: #{_ctpn_forward_fn.1} parent=1 // pred_check
      _
    $region3: #{_ctpn_forward_fn.1} parent=1 // pred_check_branch
      %10 = sbr.rel (0) target = $region5
    $region4: #{_ctpn_forward_fn.1} parent=1 // pred_region
      %s12 = ssub.s32 16, 16
      %13 = vsyncadd [#allocation5], %s12
      %s15 = sshll.u32 %s0, 4
      %s16 = int_to_ptr.vmem [resolvable:$true] %s15
      %18 = dma.vmem_to_smem %s16, 16, [#allocation3], [#allocation5]
    $region5: #{_ctpn_forward_fn.1} parent=1 // pred_fallthru
      _
    // Predicated region
    $region6: #{_ctpn_forward_fn.1} parent=1 // pred_check
      _
    $region7: #{_ctpn_forward_fn.1} parent=1 // pred_check_branch
      %20 = sbr.rel (0) target = $region9
    $region8: #{_ctpn_forward_fn.1} parent=1 // pred_region
      _
    $region9: #{_ctpn_forward_fn.1} parent=1 // pred_fallthru
      _
    // Predicated region
    $region10: #{_ctpn_forward_fn.1} parent=1 // pred_check
      _
    $region11: #{_ctpn_forward_fn.1} parent=1 // pred_check_branch
      %22 = sbr.rel (0) target = $region13
    $region12: #{_ctpn_forward_fn.1} parent=1 // pred_region
      %23 = dma.done [#allocation5], 16
    $region13: #{_ctpn_forward_fn.1} parent=1 // pred_fallthru
      _
    %24 = sfence
    %s25 = sld [smem:[#allocation3]]
    %s26 = sld [smem:[#allocation3 + $0x1]]
    %s27 = sld [smem:[#allocation3 + $0x2]]
    %s28 = sld [smem:[#allocation3 + $0x3]]
    %s29 = sld [smem:[#allocation3 + $0x4]]
    %v30 = vld [vmem:[%s1] sm:$0xff]
    %v31 = vld [vmem:[%s1 + $0x8] sm:$0xff]
    %v32 = vsub.f32 %v30, %v31
    %v33 = vand.u32 2147483647, %v32
    %vm34 = vcmp.lt.f32.partialorder %v33, 1.0
    %v35 = vmul.f32 %v32, 0.5
    %v36 = vmul.f32 %v35, %v32
    %v37 = vsub.f32 %v33, 0.5
    %v38 = vsel %vm34, %v36, %v37
    %vm39 = vcmp.gt.f32.partialorder %v30, 0.5
    %v41 = vrot.slane %v30, 1
    %v43 = vsub.f32 %v30, %v41
    %v44 = vrot.slane %v30, 7
    %v46 = vsub.f32 %v30, %v44
    %v48 = vrot.slane %v43, 6
    %v51 = vrot.slane %v46, 7
    %v53 = vsel %vm39, %v48, %v51
    %v54 = vmax.f32 %v53, 0.0
    %v55 = vand.u32 2147483647, %v53
    %v56 = vsub.f32 0.0, %v55
    %v57 = vmul.f32 %v56, 1.442695
    %v58 = vpow.pop %v57
    %v59 = vadd.f32 %v58, 1.0
    %v60 = vlog2.pop %v59
    %v61 = vmul.f32 %v60, 0.6931472
    %v62 = vadd.f32 %v54, %v61
    %v63 = vrot.slane %v30, 4
    %v65 = vmul.f32 %v62, %v63
    %v67 = vrot.slane %v38, 1
    %v69 = vadd.f32 %v38, %v67
    %v70 = vmul.f32 %v69, 0.5
    %v71 = vmul.f32 %v70, %v63
    %v73 = vrot.slane %v31, 5
    %v75 = vmul.f32 %v38, %v73
    %vm76 = vcmask 1042434
    %v77 = vsel %vm76, %v65, 0.0
    %78 = vadd.xlane.f32.xlu0 %v77
    %v79 = vpop.xlane.xlu0 %78
    %v80 = vstv %s25
    %v81 = vmul.f32 %v79, %v80
    %vm82 = vcmask 1043459
    %v83 = vsel %vm82, %v71, 0.0
    %84 = vadd.xlane.f32.xlu0 %v83
    %v85 = vpop.xlane.xlu0 %84
    %v86 = vstv %s26
    %v87 = vmul.f32 %v85, %v86
    %vm88 = vcmask 1045509
    %v89 = vsel %vm88, %v75, 0.0
    %90 = vadd.xlane.f32.xlu0 %v89
    %v91 = vpop.xlane.xlu0 %90
    %v92 = vstv %s27
    %v93 = vmul.f32 %v91, %v92
    %v94 = vstv %s28
    %v95 = vmul.f32 %v94, %v87
    %v97 = vrot.slane %v95, 1
    %v99 = vadd.f32 %v81, %v97
    %v100 = vstv %s29
    %v101 = vmul.f32 %v100, %v93
    %v103 = vrot.slane %v101, 3
    %v105 = vadd.f32 %v99, %v103
    %vm106 = vcmask 2050
    %107 = vst.msk [vmem:[#allocation2 - $0x2] sm:$0x4] %vm106, %v105
    %108 = vst.msk [vmem:[#allocation2 - $0x1] sm:$0x4] %vm106, %v81
    %vm109 = vcmask 3075
    %110 = vst.msk [vmem:[#allocation2 - $0x1] sm:$0x8] %vm109, %v87
    %vm111 = vcmask 5125
    %112 = vst.msk [vmem:[#allocation2 - $0x2] sm:$0x20] %vm111, %v93
    %v113 = vld [vmem:[#allocation2] sm:$0x1]
    %s114 = vtos %v113
    %s115 = scalar_lea.smem [#allocation6], 0
    %116 = sst [smem:[%s115]] %s114
    %v117 = vld [vmem:[#allocation2 + $0x1] sm:$0x1]
    %s118 = vtos %v117
    %s119 = scalar_lea.smem [#allocation6], 1
    %120 = sst [smem:[%s119]] %s118
    %v121 = vld [vmem:[#allocation2 + $0x2] sm:$0x1]
    %s122 = vtos %v121
    %s123 = scalar_lea.smem [#allocation6], 2
    %124 = sst [smem:[%s123]] %s122
    %v125 = vld [vmem:[#allocation2 + $0x3] sm:$0x1]
    %s126 = vtos %v125
    %s127 = scalar_lea.smem [#allocation6], 3
    %128 = sst [smem:[%s127]] %s126
    // Predicated region
    $region14: #{_ctpn_forward_fn.1} parent=1 // pred_check
      _
    $region15: #{_ctpn_forward_fn.1} parent=1 // pred_check_branch
      %130 = sbr.rel (0) target = $region17
    $region16: #{_ctpn_forward_fn.1} parent=1 // pred_region
      %s132 = ssub.s32 16, 16
      %133 = vsyncadd [#allocation4], %s132
      %136 = dma.smem_to_hbm [#allocation6], 16, %s2, [#allocation4]
    $region17: #{_ctpn_forward_fn.1} parent=1 // pred_fallthru
      _
    // Predicated region
    $region18: #{_ctpn_forward_fn.1} parent=1 // pred_check
      _
    $region19: #{_ctpn_forward_fn.1} parent=1 // pred_check_branch
      %138 = sbr.rel (0) target = $region21
    $region20: #{_ctpn_forward_fn.1} parent=1 // pred_region
      %139 = dma.done [#allocation4], 16
    $region21: #{_ctpn_forward_fn.1} parent=1 // pred_fallthru
      _
    %140 = sfence
    %141 = vsyncpa [#allocation4], 1
    %142 = vsyncpa [#allocation5], 1

</llo_original>
